<compile_context>
chip_gen: v7x
topology: tpu7x:2x2x1
jax: 0.10.0
libtpu: 0.0.40
codegen_flags: <defaults>
</compile_context>

<pallas_src>
import jax
import jax.numpy as jnp
from jax import lax
from jax.experimental import pallas as pl
from jax.experimental.pallas import tpu as pltpu


def _round_up(n, m):
    return ((n + m - 1) // m) * m


# Packed-bias layout: 8-aligned sublane offsets inside one (200, 1) f32 blob.
_B1_OFF, _B2_OFF, _B3_OFF, _B5_OFF, _B_LEN = 0, 112, 152, 192, 200


def mlp_kernel(x_ref, w1_ref, w2_ref, w3_ref, w5_ref, b_ref, o_ref):
    cdt = w1_ref.dtype                       # MXU input dtype (bf16 or f32)

    # x arrives batch-major (TB, 81) straight from HBM (no wrapper transpose /
    # pad); cast to the MXU input dtype in-register.
    x = x_ref[...].astype(cdt)

    # Biases: one packed (200, 1) f32 operand, static 8-aligned slices (views).
    b1 = b_ref[pl.ds(_B1_OFF, 108), :]
    b2 = b_ref[pl.ds(_B2_OFF, 36), :]
    b3 = b_ref[pl.ds(_B3_OFF, 36), :]
    b5 = b_ref[pl.ds(_B5_OFF, 2), :]

    # Contract w's K dim with x's feature dim: (108, 81) . (TB, 81) -> (108, TB)
    dn = (((1,), (1,)), ((), ()))

    # fc1 + ReLU (f32 accumulation, f32 bias/activation math).
    h = lax.dot_general(w1_ref[...], x, dimension_numbers=dn,
                        preferred_element_type=jnp.float32) + b1
    h = jnp.maximum(h, 0.0).astype(cdt)

    # fc2 + ReLU: (36, 108) @ (108, TB) -> (36, TB)
    h = jnp.dot(w2_ref[...], h, preferred_element_type=jnp.float32) + b2
    h = jnp.maximum(h, 0.0).astype(cdt)

    # fc3 + Sigmoid: (36, 36) @ (36, TB) -> (36, TB); exp + reciprocal on EUP.
    h = jnp.dot(w3_ref[...], h, preferred_element_type=jnp.float32) + b3
    h = pl.reciprocal(1.0 + jnp.exp(-h), approx=False).astype(cdt)

    # fc5 (linear head): (2, 36) @ (36, TB) -> (2, TB); lane-dense store.
    out = jnp.dot(w5_ref[...], h, preferred_element_type=jnp.float32) + b5
    o_ref[...] = out.astype(o_ref.dtype)


def mlp_forward(x, params, *, tb=4096, compute_dtype=jnp.bfloat16):
    """Forward pass of `network`.

    x:       (B, 81) float32, PyTorch batch-major convention.
    params:  PyTorch-layout params: w{n}: (out, in), b{n}: (out,).
    tb:      batch tile (lane dim of the feature-major activations); multiple
             of 128, sweep 2048-8192 for large B.
    compute_dtype: MXU input dtype (bf16 default); accumulation stays f32.
    """
    B, F = x.shape
    assert F == 81

    # Lane-dense batch tile; keep >= 2 grid steps whenever the batch allows it
    # so the "parallel" grid axis can span v7x's 2 TensorCores.
    tb = _round_up(max(tb, 128), 128)
    tb = min(tb,
             max(128, _round_up(pl.cdiv(B, 2), 128)),   # >= 2 steps if B > 128
             _round_up(B, 128))                          # never exceed padded B
    grid = (pl.cdiv(B, tb),)

    w1 = params["w1"].astype(compute_dtype)              # (108, 81)
    w2 = params["w2"].astype(compute_dtype)              # (36, 108)
    w3 = params["w3"].astype(compute_dtype)              # (36, 36)
    w5 = params["w5"].astype(compute_dtype)              # (2, 36)

    # Pack the four biases (f32) into one operand at 8-aligned sublane offsets.
    b_all = jnp.zeros((_B_LEN, 1), jnp.float32)
    b_all = b_all.at[_B1_OFF:_B1_OFF + 108, 0].set(params["b1"].astype(jnp.float32))
    b_all = b_all.at[_B2_OFF:_B2_OFF + 36, 0].set(params["b2"].astype(jnp.float32))
    b_all = b_all.at[_B3_OFF:_B3_OFF + 36, 0].set(params["b3"].astype(jnp.float32))
    b_all = b_all.at[_B5_OFF:_B5_OFF + 2, 0].set(params["b5"].astype(jnp.float32))

    const = lambda i: (0, 0)   # weights/biases: same block every step -> stay VMEM-resident
    in_specs = [
        pl.BlockSpec((tb, 81), lambda i: (i, 0)),        # x tile, pipelined over batch
        pl.BlockSpec(w1.shape, const),
        pl.BlockSpec(w2.shape, const),
        pl.BlockSpec(w3.shape, const),
        pl.BlockSpec(w5.shape, const),
        pl.BlockSpec(b_all.shape, const),
    ]
    out_specs = pl.BlockSpec((2, tb), lambda i: (0, i))  # feature-major, lane-dense

    out_t = pl.pallas_call(
        mlp_kernel,
        out_shape=jax.ShapeDtypeStruct((2, B), jnp.float32),
        grid=grid,
        in_specs=in_specs,
        out_specs=out_specs,
        compiler_params=pltpu.CompilerParams(
            dimension_semantics=("parallel",),   # batch tiles across TCs (v7x megacore)
        ),
    )(x, w1, w2, w3, w5, b_all)

    # Back to PyTorch (B, 2) layout (tiny: B*2 floats).
    return jnp.transpose(out_t)


def init_params(key):
    """PyTorch nn.Linear default init: U(-1/sqrt(fan_in), +1/sqrt(fan_in)).
    Weights stored PyTorch-style as (out, in); biases as (out,)."""
    dims = [(81, 108), (108, 36), (36, 36), (36, 2)]
    names = ["1", "2", "3", "5"]
    params = {}
    for (fan_in, fan_out), n in zip(dims, names):
        key, kw, kb = jax.random.split(key, 3)
        bound = 1.0 / (fan_in ** 0.5)
        params[f"w{n}"] = jax.random.uniform(
            kw, (fan_out, fan_in), jnp.float32, -bound, bound)
        params[f"b{n}"] = jax.random.uniform(
            kb, (fan_out,), jnp.float32, -bound, bound)
    return params


def reference_forward(x, params):
    """Pure-JAX reference (PyTorch semantics) for sanity checking."""
    h = jnp.maximum(x @ params["w1"].T + params["b1"], 0.0)
    h = jnp.maximum(h @ params["w2"].T + params["b2"], 0.0)
    h = jax.nn.sigmoid(h @ params["w3"].T + params["b3"])
    return h @ params["w5"].T + params["b5"]


if __name__ == "__main__":
    key = jax.random.PRNGKey(0)
    key, kx = jax.random.split(key)
    params = init_params(key)

    # f32 MXU path, tiny batch (single ragged tile): tight tolerance.
    x = jax.random.normal(kx, (8, 81), dtype=jnp.float32)
    out = jax.block_until_ready(mlp_forward(x, params, compute_dtype=jnp.float32))
    ref = reference_forward(x, params)
    assert out.shape == (8, 2)
    assert jnp.allclose(out, ref, atol=1e-5, rtol=1e-5)

    # Ragged batch, multi-step pipelined grid (no wrapper-side padding), f32.
    x2 = jax.random.normal(jax.random.PRNGKey(1), (300, 81), dtype=jnp.float32)
    out2 = jax.block_until_ready(
        mlp_forward(x2, params, tb=128, compute_dtype=jnp.float32))
    ref2 = reference_forward(x2, params)
    assert out2.shape == (300, 2)
    assert jnp.allclose(out2, ref2, atol=1e-5, rtol=1e-5)

    # Default bf16 MXU-input path (f32 accumulation/bias/activations) -- looser
    # tolerance because the activations themselves are cast to bf16.
    out3 = jax.block_until_ready(mlp_forward(x2, params))
    assert out3.shape == (300, 2)
    assert jnp.allclose(out3, ref2, atol=5e-2, rtol=5e-2)

    print("KERNEL_OK")
</pallas_src>

<mosaic_0001>
module attributes {stable_mosaic.version = 11 : i64} {
  func.func @mlp_kernel(%arg0: i32, %arg1: memref<128x81xf32, #tpu.memory_space<vmem>>, %arg2: memref<108x81xf32, #tpu.memory_space<vmem>>, %arg3: memref<36x108xf32, #tpu.memory_space<vmem>>, %arg4: memref<36x36xf32, #tpu.memory_space<vmem>>, %arg5: memref<2x36xf32, #tpu.memory_space<vmem>>, %arg6: memref<200x1xf32, #tpu.memory_space<vmem>>, %arg7: memref<2x128xf32, #tpu.memory_space<vmem>>) attributes {dimension_semantics = [#tpu.dimension_semantics<parallel>], iteration_bounds = array<i64: 1>, scalar_prefetch = 0 : i64, scratch_operands = 0 : i64, tpu.core_type = #tpu.core_type<tc>, window_params = [{transform_indices = @transform_0, window_bounds = array<i64: 128, 81>}, {pipeline_mode = #tpu.pipeline_mode<synchronous>, transform_indices = @transform_1, window_bounds = array<i64: 108, 81>}, {pipeline_mode = #tpu.pipeline_mode<synchronous>, transform_indices = @transform_2, window_bounds = array<i64: 36, 108>}, {pipeline_mode = #tpu.pipeline_mode<synchronous>, transform_indices = @transform_3, window_bounds = array<i64: 36, 36>}, {pipeline_mode = #tpu.pipeline_mode<synchronous>, transform_indices = @transform_4, window_bounds = array<i64: 2, 36>}, {pipeline_mode = #tpu.pipeline_mode<synchronous>, transform_indices = @transform_5, window_bounds = array<i64: 200, 1>}, {transform_indices = @transform_6, window_bounds = array<i64: 2, 128>}]} {
    %c0 = arith.constant 0 : index
    %c0_0 = arith.constant 0 : index
    %0 = vector.load %arg1[%c0, %c0_0] : memref<128x81xf32, #tpu.memory_space<vmem>>, vector<128x81xf32>
    %c0_1 = arith.constant 0 : index
    %c0_2 = arith.constant 0 : index
    %1 = vector.load %arg6[%c0_1, %c0_2] : memref<200x1xf32, #tpu.memory_space<vmem>>, vector<108x1xf32>
    %c112 = arith.constant 112 : index
    %c0_3 = arith.constant 0 : index
    %2 = vector.load %arg6[%c112, %c0_3] : memref<200x1xf32, #tpu.memory_space<vmem>>, vector<36x1xf32>
    %c152 = arith.constant 152 : index
    %c0_4 = arith.constant 0 : index
    %3 = vector.load %arg6[%c152, %c0_4] : memref<200x1xf32, #tpu.memory_space<vmem>>, vector<36x1xf32>
    %c192 = arith.constant 192 : index
    %c0_5 = arith.constant 0 : index
    %4 = vector.load %arg6[%c192, %c0_5] : memref<200x1xf32, #tpu.memory_space<vmem>>, vector<2x1xf32>
    %c0_6 = arith.constant 0 : index
    %c0_7 = arith.constant 0 : index
    %5 = vector.load %arg2[%c0_6, %c0_7] : memref<108x81xf32, #tpu.memory_space<vmem>>, vector<108x81xf32>
    %cst = arith.constant dense<0.000000e+00> : vector<108x128xf32>
    %6 = tpu.matmul %5, %0, %cst {dimension_numbers = #tpu.dot_dimension_numbers<[1], [1], [0], [0], [0, 0, 1, 0], [], []>} : vector<108x81xf32>, vector<128x81xf32>, vector<108x128xf32> -> vector<108x128xf32>
    %7 = vector.broadcast %1 : vector<108x1xf32> to vector<108x128xf32>
    %8 = arith.addf %6, %7 : vector<108x128xf32>
    %cst_8 = arith.constant 0.000000e+00 : f32
    %9 = vector.broadcast %cst_8 : f32 to vector<108x128xf32>
    %10 = arith.maximumf %8, %9 : vector<108x128xf32>
    %c0_9 = arith.constant 0 : index
    %c0_10 = arith.constant 0 : index
    %11 = vector.load %arg3[%c0_9, %c0_10] : memref<36x108xf32, #tpu.memory_space<vmem>>, vector<36x108xf32>
    %cst_11 = arith.constant dense<0.000000e+00> : vector<36x128xf32>
    %12 = tpu.matmul %11, %10, %cst_11 {dimension_numbers = #tpu.dot_dimension_numbers<[1], [0], [0], [1], [0, 0, 1, 1], [], []>} : vector<36x108xf32>, vector<108x128xf32>, vector<36x128xf32> -> vector<36x128xf32>
    %13 = vector.broadcast %2 : vector<36x1xf32> to vector<36x128xf32>
    %14 = arith.addf %12, %13 : vector<36x128xf32>
    %cst_12 = arith.constant 0.000000e+00 : f32
    %15 = vector.broadcast %cst_12 : f32 to vector<36x128xf32>
    %16 = arith.maximumf %14, %15 : vector<36x128xf32>
    %c0_13 = arith.constant 0 : index
    %c0_14 = arith.constant 0 : index
    %17 = vector.load %arg4[%c0_13, %c0_14] : memref<36x36xf32, #tpu.memory_space<vmem>>, vector<36x36xf32>
    %cst_15 = arith.constant dense<0.000000e+00> : vector<36x128xf32>
    %18 = tpu.matmul %17, %16, %cst_15 {dimension_numbers = #tpu.dot_dimension_numbers<[1], [0], [0], [1], [0, 0, 1, 1], [], []>} : vector<36x36xf32>, vector<36x128xf32>, vector<36x128xf32> -> vector<36x128xf32>
    %19 = vector.broadcast %3 : vector<36x1xf32> to vector<36x128xf32>
    %20 = arith.addf %18, %19 : vector<36x128xf32>
    %cst_16 = arith.constant 0.000000e+00 : f32
    %21 = vector.broadcast %cst_16 : f32 to vector<36x128xf32>
    %22 = arith.subf %21, %20 : vector<36x128xf32>
    %23 = math.exp %22 : vector<36x128xf32>
    %cst_17 = arith.constant 1.000000e+00 : f32
    %24 = vector.broadcast %cst_17 : f32 to vector<36x128xf32>
    %25 = arith.addf %24, %23 : vector<36x128xf32>
    %26 = tpu.reciprocal %25 : vector<36x128xf32> -> vector<36x128xf32>
    %c0_18 = arith.constant 0 : index
    %c0_19 = arith.constant 0 : index
    %27 = vector.load %arg5[%c0_18, %c0_19] : memref<2x36xf32, #tpu.memory_space<vmem>>, vector<2x36xf32>
    %cst_20 = arith.constant dense<0.000000e+00> : vector<2x128xf32>
    %28 = tpu.matmul %27, %26, %cst_20 {dimension_numbers = #tpu.dot_dimension_numbers<[1], [0], [0], [1], [0, 0, 1, 1], [], []>} : vector<2x36xf32>, vector<36x128xf32>, vector<2x128xf32> -> vector<2x128xf32>
    %29 = vector.broadcast %4 : vector<2x1xf32> to vector<2x128xf32>
    %30 = arith.addf %28, %29 : vector<2x128xf32>
    %c0_21 = arith.constant 0 : index
    %c0_22 = arith.constant 0 : index
    %31 = vector.load %arg7[%c0_21, %c0_22] : memref<2x128xf32, #tpu.memory_space<vmem>>, vector<2x128xf32>
    tpu.vector_store %arg7[%c0_21, %c0_22], %30 {strides = array<i32>} : memref<2x128xf32, #tpu.memory_space<vmem>>, vector<2x128xf32>,
    return
  }
  func.func @transform_0(%arg0: i32) -> (i32, i32) {
    %c0_i32 = arith.constant 0 : i32
    %c0_i32_0 = arith.constant 0 : i32
    return %arg0, %c0_i32 : i32, i32
  }
  func.func @transform_1(%arg0: i32) -> (i32, i32) {
    %c0_i32 = arith.constant 0 : i32
    %c0_i32_0 = arith.constant 0 : i32
    %c0_i32_1 = arith.constant 0 : i32
    return %c0_i32, %c0_i32_0 : i32, i32
  }
  func.func @transform_2(%arg0: i32) -> (i32, i32) {
    %c0_i32 = arith.constant 0 : i32
    %c0_i32_0 = arith.constant 0 : i32
    %c0_i32_1 = arith.constant 0 : i32
    return %c0_i32, %c0_i32_0 : i32, i32
  }
  func.func @transform_3(%arg0: i32) -> (i32, i32) {
    %c0_i32 = arith.constant 0 : i32
    %c0_i32_0 = arith.constant 0 : i32
    %c0_i32_1 = arith.constant 0 : i32
    return %c0_i32, %c0_i32_0 : i32, i32
  }
  func.func @transform_4(%arg0: i32) -> (i32, i32) {
    %c0_i32 = arith.constant 0 : i32
    %c0_i32_0 = arith.constant 0 : i32
    %c0_i32_1 = arith.constant 0 : i32
    return %c0_i32, %c0_i32_0 : i32, i32
  }
  func.func @transform_5(%arg0: i32) -> (i32, i32) {
    %c0_i32 = arith.constant 0 : i32
    %c0_i32_0 = arith.constant 0 : i32
    %c0_i32_1 = arith.constant 0 : i32
    return %c0_i32, %c0_i32_0 : i32, i32
  }
  func.func @transform_6(%arg0: i32) -> (i32, i32) {
    %c0_i32 = arith.constant 0 : i32
    %c0_i32_0 = arith.constant 0 : i32
    return %c0_i32, %arg0 : i32, i32
  }
}

</mosaic_0001>

<llo_original>
// kernel: tpu_custom_call.1
$region0: #{tpu_custom_call.1}
  #allocation0 [shape = 'u32[]', space=smem, size = 0x4, offset = 0x4, fixed_abs, tag = 'smem constant byte address 0x4 - core index']
  #allocation1 [shape = 'u32[144,128]{1,0:T(1,128)}', space=vmem, size = 0x12000, scoped, tag = 'internal scratch']
  %s0 = inlined_call_operand.vmem [shape: f32[8,81], index: 0, kind: input, shape index: {}]
  %s1 = inlined_call_operand.vmem [shape: f32[108,81], index: 1, kind: input, shape index: {}]
  %s2 = inlined_call_operand.vmem [shape: f32[36,108], index: 2, kind: input, shape index: {}]
  %s3 = inlined_call_operand.vmem [shape: f32[36,36], index: 3, kind: input, shape index: {}]
  %s4 = inlined_call_operand.vmem [shape: f32[2,36], index: 4, kind: input, shape index: {}]
  %s5 = inlined_call_operand.vmem [shape: f32[200,1], index: 5, kind: input, shape index: {}]
  %s6 = inlined_call_operand.hbm [shape: f32[2,8], index: 6, kind: output, shape index: {}]
  %s7 = sld [smem:[#allocation0]]
  $region34: #{tpu_custom_call.1} parent=0
    _
  %s9 = ssub.s32 1, %s7
  %s10 = scalar_select 0, %s9, %s7
  $region1: #{tpu_custom_call.1} parent=0
    #allocation2 [shape = 'u8[1024]{0}', space=vmem, size = 0x400, scoped, tag = 'output window, operand 0, single buffered']
    #allocation3 [shape = 's32[1]{0}', space=sflag, size = 0x4, scoped, tag = 'scoped memory for tpu_custom_call.1']
    %11 = vsyncpa [#allocation3], 0
    // Predicated region
    $region2: #{tpu_custom_call.1} parent=1 // pred_check
      _
    $region3: #{tpu_custom_call.1} parent=1 // pred_check_branch
      %13 = sbr.rel (0) target = $region5
    $region4: #{tpu_custom_call.1} parent=1 // pred_region
      _
    $region5: #{tpu_custom_call.1} parent=1 // pred_fallthru
      _
    // Predicated region
    $region6: #{tpu_custom_call.1} parent=1 // pred_check
      _
    $region7: #{tpu_custom_call.1} parent=1 // pred_check_branch
      %15 = sbr.rel (0) target = $region9
    $region8: #{tpu_custom_call.1} parent=1 // pred_region
      _
    $region9: #{tpu_custom_call.1} parent=1 // pred_fallthru
      _
    // Predicated region
    $region10: #{tpu_custom_call.1} parent=1 // pred_check
      _
    $region11: #{tpu_custom_call.1} parent=1 // pred_check_branch
      %17 = sbr.rel (0) target = $region13
    $region12: #{tpu_custom_call.1} parent=1 // pred_region
      _
    $region13: #{tpu_custom_call.1} parent=1 // pred_fallthru
      _
    // Predicated region
    $region14: #{tpu_custom_call.1} parent=1 // pred_check
      _
    $region15: #{tpu_custom_call.1} parent=1 // pred_check_branch
      %19 = sbr.rel (0) target = $region17
    $region16: #{tpu_custom_call.1} parent=1 // pred_region
      _
    $region17: #{tpu_custom_call.1} parent=1 // pred_fallthru
      _
    // Predicated region
    $region18: #{tpu_custom_call.1} parent=1 // pred_check
      _
    $region19: #{tpu_custom_call.1} parent=1 // pred_check_branch
      %21 = sbr.rel (0) target = $region21
    $region20: #{tpu_custom_call.1} parent=1 // pred_region
      _
    $region21: #{tpu_custom_call.1} parent=1 // pred_fallthru
      _
    // Predicated region
    $region22: #{tpu_custom_call.1} parent=1 // pred_check
      _
    $region23: #{tpu_custom_call.1} parent=1 // pred_check_branch
      %23 = sbr.rel (0) target = $region25
    $region24: #{tpu_custom_call.1} parent=1 // pred_region
      _
    $region25: #{tpu_custom_call.1} parent=1 // pred_fallthru
      _
    %v24 = vld [vmem:[%s0] sm:$0xff]
    %v25 = vld [vmem:[%s0 + $0x8] sm:$0xff]
    %v26 = vld [vmem:[%s0 + $0x10] sm:$0xff]
    %v27 = vld [vmem:[%s0 + $0x18] sm:$0xff]
    %v28 = vld [vmem:[%s0 + $0x20] sm:$0xff]
    %v29 = vld [vmem:[%s0 + $0x28] sm:$0xff]
    %v30 = vld [vmem:[%s0 + $0x30] sm:$0xff]
    %v31 = vld [vmem:[%s0 + $0x38] sm:$0xff]
    %v32 = vld [vmem:[%s0 + $0x40] sm:$0xff]
    %v33 = vld [vmem:[%s0 + $0x48] sm:$0xff]
    %v34 = vld [vmem:[%s0 + $0x50] sm:$0xff]
    %v35 = vld [vmem:[%s0 + $0x58] sm:$0xff]
    %v36 = vld [vmem:[%s0 + $0x60] sm:$0xff]
    %v37 = vld [vmem:[%s0 + $0x68] sm:$0xff]
    %v38 = vld [vmem:[%s0 + $0x70] sm:$0xff]
    %v39 = vld [vmem:[%s0 + $0x78] sm:$0xff]
    %v40 = vld [vmem:[%s5] sm:$0xff]
    %v41 = vld [vmem:[%s5 + $0x8] sm:$0xff]
    %v42 = vld [vmem:[%s5 + $0x10] sm:$0xff]
    %v43 = vld [vmem:[%s5 + $0x18] sm:$0xff]
    %v44 = vld [vmem:[%s5 + $0x20] sm:$0xff]
    %v45 = vld [vmem:[%s5 + $0x28] sm:$0xff]
    %v46 = vld [vmem:[%s5 + $0x30] sm:$0xff]
    %v47 = vld [vmem:[%s5 + $0x38] sm:$0xff]
    %v48 = vld [vmem:[%s5 + $0x40] sm:$0xff]
    %v49 = vld [vmem:[%s5 + $0x48] sm:$0xff]
    %v50 = vld [vmem:[%s5 + $0x50] sm:$0xff]
    %v51 = vld [vmem:[%s5 + $0x58] sm:$0xff]
    %v52 = vld [vmem:[%s5 + $0x60] sm:$0xff]
    %v53 = vld [vmem:[%s5 + $0x68] sm:$0xf]
    %v54 = vld [vmem:[%s5 + $0x70] sm:$0xff]
    %v55 = vld [vmem:[%s5 + $0x78] sm:$0xff]
    %v56 = vld [vmem:[%s5 + $0x80] sm:$0xff]
    %v57 = vld [vmem:[%s5 + $0x88] sm:$0xff]
    %v58 = vld [vmem:[%s5 + $0x90] sm:$0xf]
    %v59 = vld [vmem:[%s5 + $0x98] sm:$0xff]
    %v60 = vld [vmem:[%s5 + $0xa0] sm:$0xff]
    %v61 = vld [vmem:[%s5 + $0xa8] sm:$0xff]
    %v62 = vld [vmem:[%s5 + $0xb0] sm:$0xff]
    %v63 = vld [vmem:[%s5 + $0xb8] sm:$0xf]
    %v64 = vld [vmem:[%s5 + $0xc0] sm:$0x3]
    %v65 = vld [vmem:[%s1] sm:$0xff]
    %v66 = vld [vmem:[%s1 + $0x8] sm:$0xff]
    %v67 = vld [vmem:[%s1 + $0x10] sm:$0xff]
    %v68 = vld [vmem:[%s1 + $0x18] sm:$0xff]
    %v69 = vld [vmem:[%s1 + $0x20] sm:$0xff]
    %v70 = vld [vmem:[%s1 + $0x28] sm:$0xff]
    %v71 = vld [vmem:[%s1 + $0x30] sm:$0xff]
    %v72 = vld [vmem:[%s1 + $0x38] sm:$0xff]
    %v73 = vld [vmem:[%s1 + $0x40] sm:$0xff]
    %v74 = vld [vmem:[%s1 + $0x48] sm:$0xff]
    %v75 = vld [vmem:[%s1 + $0x50] sm:$0xff]
    %v76 = vld [vmem:[%s1 + $0x58] sm:$0xff]
    %v77 = vld [vmem:[%s1 + $0x60] sm:$0xff]
    %v78 = vld [vmem:[%s1 + $0x68] sm:$0xf]
    %80 = vset.pattern.permute.xlu0 0
    %81 = vperm.xlu0 %80, %v40
    %v82 = vpop.permute.xlu0 %81
    %85 = vset.pattern.permute.xlu0 0
    %86 = vperm.xlu0 %85, %v41
    %v87 = vpop.permute.xlu0 %86
    %90 = vset.pattern.permute.xlu0 0
    %91 = vperm.xlu0 %90, %v42
    %v92 = vpop.permute.xlu0 %91
    %95 = vset.pattern.permute.xlu0 0
    %96 = vperm.xlu0 %95, %v43
    %v97 = vpop.permute.xlu0 %96
    %100 = vset.pattern.permute.xlu0 0
    %101 = vperm.xlu0 %100, %v44
    %v102 = vpop.permute.xlu0 %101
    %105 = vset.pattern.permute.xlu0 0
    %106 = vperm.xlu0 %105, %v45
    %v107 = vpop.permute.xlu0 %106
    %110 = vset.pattern.permute.xlu0 0
    %111 = vperm.xlu0 %110, %v46
    %v112 = vpop.permute.xlu0 %111
    %115 = vset.pattern.permute.xlu0 0
    %116 = vperm.xlu0 %115, %v47
    %v117 = vpop.permute.xlu0 %116
    %120 = vset.pattern.permute.xlu0 0
    %121 = vperm.xlu0 %120, %v48
    %v122 = vpop.permute.xlu0 %121
    %125 = vset.pattern.permute.xlu0 0
    %126 = vperm.xlu0 %125, %v49
    %v127 = vpop.permute.xlu0 %126
    %130 = vset.pattern.permute.xlu0 0
    %131 = vperm.xlu0 %130, %v50
    %v132 = vpop.permute.xlu0 %131
    %135 = vset.pattern.permute.xlu0 0
    %136 = vperm.xlu0 %135, %v51
    %v137 = vpop.permute.xlu0 %136
    %140 = vset.pattern.permute.xlu0 0
    %141 = vperm.xlu0 %140, %v52
    %v142 = vpop.permute.xlu0 %141
    %145 = vset.pattern.permute.xlu0 0
    %146 = vperm.xlu0 %145, %v53
    %v147 = vpop.permute.xlu0 %146
    %vm149 = vcmask 662528
    %v151 = vsel %vm149, %v65, 0
    %v154 = vsel %vm149, %v66, 0
    %v157 = vsel %vm149, %v67, 0
    %v160 = vsel %vm149, %v68, 0
    %v163 = vsel %vm149, %v69, 0
    %v166 = vsel %vm149, %v70, 0
    %v169 = vsel %vm149, %v71, 0
    %v172 = vsel %vm149, %v72, 0
    %v175 = vsel %vm149, %v73, 0
    %v178 = vsel %vm149, %v74, 0
    %v181 = vsel %vm149, %v75, 0
    %v184 = vsel %vm149, %v76, 0
    %v187 = vsel %vm149, %v77, 0
    %v190 = vsel %vm149, %v78, 0
    %v193 = vsel %vm149, %v24, 0
    %v196 = vsel %vm149, %v25, 0
    %v199 = vsel %vm149, %v26, 0
    %v202 = vsel %vm149, %v27, 0
    %v205 = vsel %vm149, %v28, 0
    %v208 = vsel %vm149, %v29, 0
    %v211 = vsel %vm149, %v30, 0
    %v214 = vsel %vm149, %v31, 0
    %v217 = vsel %vm149, %v32, 0
    %v220 = vsel %vm149, %v33, 0
    %v223 = vsel %vm149, %v34, 0
    %v226 = vsel %vm149, %v35, 0
    %v229 = vsel %vm149, %v36, 0
    %v232 = vsel %vm149, %v37, 0
    %v235 = vsel %vm149, %v38, 0
    %v238 = vsel %vm149, %v39, 0
    %240 = vmatprep.subr.mxu0 0.0
    %241 = vmatpush1.xpose.msra.mxu0 %v193
    %242 = vmatprep.subr.mxu0 0.0
    %243 = vmatpush1.xpose.msra.mxu0 %v196
    %244 = vmatprep.subr.mxu0 0.0
    %245 = vmatpush1.xpose.msra.mxu0 %v199
    %246 = vmatprep.subr.mxu0 0.0
    %247 = vmatpush1.xpose.msra.mxu0 %v202
    %248 = vmatprep.subr.mxu0 0.0
    %249 = vmatpush1.xpose.msra.mxu0 %v205
    %250 = vmatprep.subr.mxu0 0.0
    %251 = vmatpush1.xpose.msra.mxu0 %v208
    %252 = vmatprep.subr.mxu0 0.0
    %253 = vmatpush1.xpose.msra.mxu0 %v211
    %254 = vmatprep.subr.mxu0 0.0
    %255 = vmatpush1.xpose.msra.mxu0 %v214
    %256 = vmatprep.subr.mxu0 0.0
    %257 = vmatpush1.xpose.msra.mxu0 %v217
    %258 = vmatprep.subr.mxu0 0.0
    %259 = vmatpush1.xpose.msra.mxu0 %v220
    %260 = vmatprep.subr.mxu0 0.0
    %261 = vmatpush1.xpose.msra.mxu0 %v223
    %262 = vmatprep.subr.mxu0 0.0
    %263 = vmatpush1.xpose.msra.mxu0 %v226
    %264 = vmatprep.subr.mxu0 0.0
    %265 = vmatpush1.xpose.msra.mxu0 %v229
    %266 = vmatprep.subr.mxu0 0.0
    %267 = vmatpush1.xpose.msra.mxu0 %v232
    %268 = vmatprep.subr.mxu0 0.0
    %269 = vmatpush1.xpose.msra.mxu0 %v235
    %270 = vmatprep.subr.mxu0 0.0
    %271 = vmatpush1.xpose.msra.mxu0 %v238
    %272 = vmatprep.subr.mxu0 0.0
    %273 = vmatpush1.xpose.msra.mxu0 0.0
    %274 = vmatprep.subr.mxu0 0.0
    %275 = vmatpush1.xpose.msra.mxu0 0.0
    %276 = vmatprep.subr.mxu0 0.0
    %277 = vmatpush1.xpose.msra.mxu0 0.0
    %278 = vmatprep.subr.mxu0 0.0
    %279 = vmatpush1.xpose.msra.mxu0 0.0
    %280 = vmatprep.subr.mxu0 0.0
    %281 = vmatpush1.xpose.msra.mxu0 0.0
    %282 = vmatprep.subr.mxu0 0.0
    %283 = vmatpush1.xpose.msra.mxu0 0.0
    %284 = vmatprep.subr.mxu0 0.0
    %285 = vmatpush1.xpose.msra.mxu0 0.0
    %286 = vmatprep.subr.mxu0 0.0
    %287 = vmatpush1.xpose.msra.mxu0 0.0
    %288 = vmatprep.subr.mxu0 0.0
    %289 = vmatpush1.xpose.msra.mxu0 0.0
    %290 = vmatprep.subr.mxu0 0.0
    %291 = vmatpush1.xpose.msra.mxu0 0.0
    %292 = vmatprep.subr.mxu0 0.0
    %293 = vmatpush1.xpose.msra.mxu0 0.0
    %294 = vmatprep.subr.mxu0 0.0
    %295 = vmatpush1.xpose.msra.mxu0 0.0
    %296 = vmatprep.subr.mxu0 0.0
    %297 = vmatpush1.xpose.msra.mxu0 0.0
    %298 = vmatprep.subr.mxu0 0.0
    %299 = vmatpush1.xpose.msra.mxu0 0.0
    %300 = vmatprep.subr.mxu0 0.0
    %301 = vmatpush1.xpose.msra.mxu0 0.0
    %302 = vmatprep.subr.mxu0 0.0
    %303 = vmatpush1.xpose.msra.mxu0 0.0
    %304 = vmatprep.mubr.f32.mxu0 0.0
    %305 = vmatmul.mubr.f32.gmra.mrb[0].mxu0 %v151
    %v306 = vpop.f32.mrb[0].mxu0
    %v307 = vadd.f32 %v82, %v306
    %v308 = vpop.f32.mrb[0].mxu0
    %309 = vmatprep.mubr.f32.mxu0 0.0
    %310 = vmatmul.mubr.f32.gmra.mrb[0].mxu0 %v154
    %v311 = vpop.f32.mrb[0].mxu0
    %v312 = vadd.f32 %v87, %v311
    %v313 = vpop.f32.mrb[0].mxu0
    %314 = vmatprep.mubr.f32.mxu0 0.0
    %315 = vmatmul.mubr.f32.gmra.mrb[0].mxu0 %v157
    %v316 = vpop.f32.mrb[0].mxu0
    %v317 = vadd.f32 %v92, %v316
    %v318 = vpop.f32.mrb[0].mxu0
    %319 = vmatprep.mubr.f32.mxu0 0.0
    %320 = vmatmul.mubr.f32.gmra.mrb[0].mxu0 %v160
    %v321 = vpop.f32.mrb[0].mxu0
    %v322 = vadd.f32 %v97, %v321
    %v323 = vpop.f32.mrb[0].mxu0
    %324 = vmatprep.mubr.f32.mxu0 0.0
    %325 = vmatmul.mubr.f32.gmra.mrb[0].mxu0 %v163
    %v326 = vpop.f32.mrb[0].mxu0
    %v327 = vadd.f32 %v102, %v326
    %v328 = vpop.f32.mrb[0].mxu0
    %329 = vmatprep.mubr.f32.mxu0 0.0
    %330 = vmatmul.mubr.f32.gmra.mrb[0].mxu0 %v166
    %v331 = vpop.f32.mrb[0].mxu0
    %v332 = vadd.f32 %v107, %v331
    %v333 = vpop.f32.mrb[0].mxu0
    %334 = vmatprep.mubr.f32.mxu0 0.0
    %335 = vmatmul.mubr.f32.gmra.mrb[0].mxu0 %v169
    %v336 = vpop.f32.mrb[0].mxu0
    %v337 = vadd.f32 %v112, %v336
    %v338 = vpop.f32.mrb[0].mxu0
    %339 = vmatprep.mubr.f32.mxu0 0.0
    %340 = vmatmul.mubr.f32.gmra.mrb[0].mxu0 %v172
    %v341 = vpop.f32.mrb[0].mxu0
    %v342 = vadd.f32 %v117, %v341
    %v343 = vpop.f32.mrb[0].mxu0
    %344 = vmatprep.mubr.f32.mxu0 0.0
    %345 = vmatmul.mubr.f32.gmra.mrb[0].mxu0 %v175
    %v346 = vpop.f32.mrb[0].mxu0
    %v347 = vadd.f32 %v122, %v346
    %v348 = vpop.f32.mrb[0].mxu0
    %349 = vmatprep.mubr.f32.mxu0 0.0
    %350 = vmatmul.mubr.f32.gmra.mrb[0].mxu0 %v178
    %v351 = vpop.f32.mrb[0].mxu0
    %v352 = vadd.f32 %v127, %v351
    %v353 = vpop.f32.mrb[0].mxu0
    %354 = vmatprep.mubr.f32.mxu0 0.0
    %355 = vmatmul.mubr.f32.gmra.mrb[0].mxu0 %v181
    %v356 = vpop.f32.mrb[0].mxu0
    %v357 = vadd.f32 %v132, %v356
    %v358 = vpop.f32.mrb[0].mxu0
    %359 = vmatprep.mubr.f32.mxu0 0.0
    %360 = vmatmul.mubr.f32.gmra.mrb[0].mxu0 %v184
    %v361 = vpop.f32.mrb[0].mxu0
    %v362 = vadd.f32 %v137, %v361
    %v363 = vpop.f32.mrb[0].mxu0
    %364 = vmatprep.mubr.f32.mxu0 0.0
    %365 = vmatmul.mubr.f32.gmra.mrb[0].mxu0 %v187
    %v366 = vpop.f32.mrb[0].mxu0
    %v367 = vadd.f32 %v142, %v366
    %v368 = vpop.f32.mrb[0].mxu0
    %369 = vmatprep.mubr.f32.mxu0 0.0
    %370 = vmatmul.mubr.f32.gmra.mrb[0].mxu0 %v190
    %v371 = vpop.f32.mrb[0].mxu0
    %v372 = vadd.f32 %v147, %v371
    %v373 = vpop.f32.mrb[0].mxu0
    %374 = vdwg.mxu0
    %v375 = vmax.f32 %v307, 0.0
    %v376 = vmax.f32 %v312, 0.0
    %v377 = vmax.f32 %v317, 0.0
    %v378 = vmax.f32 %v322, 0.0
    %v379 = vmax.f32 %v327, 0.0
    %v380 = vmax.f32 %v332, 0.0
    %v381 = vmax.f32 %v337, 0.0
    %v382 = vmax.f32 %v342, 0.0
    %v383 = vmax.f32 %v347, 0.0
    %v384 = vmax.f32 %v352, 0.0
    %v385 = vmax.f32 %v357, 0.0
    %v386 = vmax.f32 %v362, 0.0
    %v387 = vmax.f32 %v367, 0.0
    %v388 = vmax.f32 %v372, 0.0
    %v389 = vld [vmem:[%s2] sm:$0xff]
    %v390 = vld [vmem:[%s2 + $0x8] sm:$0xff]
    %v391 = vld [vmem:[%s2 + $0x10] sm:$0xff]
    %v392 = vld [vmem:[%s2 + $0x18] sm:$0xff]
    %v393 = vld [vmem:[%s2 + $0x20] sm:$0xf]
    %395 = vset.pattern.permute.xlu0 0
    %396 = vperm.xlu0 %395, %v54
    %v397 = vpop.permute.xlu0 %396
    %400 = vset.pattern.permute.xlu0 0
    %401 = vperm.xlu0 %400, %v55
    %v402 = vpop.permute.xlu0 %401
    %405 = vset.pattern.permute.xlu0 0
    %406 = vperm.xlu0 %405, %v56
    %v407 = vpop.permute.xlu0 %406
    %410 = vset.pattern.permute.xlu0 0
    %411 = vperm.xlu0 %410, %v57
    %v412 = vpop.permute.xlu0 %411
    %415 = vset.pattern.permute.xlu0 0
    %416 = vperm.xlu0 %415, %v58
    %v417 = vpop.permute.xlu0 %416
    %vm419 = vcmask 883712
    %v421 = vsel %vm419, %v389, 0
    %v424 = vsel %vm419, %v390, 0
    %v427 = vsel %vm419, %v391, 0
    %v430 = vsel %vm419, %v392, 0
    %v433 = vsel %vm419, %v393, 0
    %vm435 = vcmask 1043456
    %v437 = vsel %vm435, %v388, 0
    %439 = vmatprep.subr.mxu0 0.0
    %440 = vmatpush1.msra.mxu0 %v375
    %441 = vmatprep.subr.mxu0 0.0
    %442 = vmatpush1.msra.mxu0 %v376
    %443 = vmatprep.subr.mxu0 0.0
    %444 = vmatpush1.msra.mxu0 %v377
    %445 = vmatprep.subr.mxu0 0.0
    %446 = vmatpush1.msra.mxu0 %v378
    %447 = vmatprep.subr.mxu0 0.0
    %448 = vmatpush1.msra.mxu0 %v379
    %449 = vmatprep.subr.mxu0 0.0
    %450 = vmatpush1.msra.mxu0 %v380
    %451 = vmatprep.subr.mxu0 0.0
    %452 = vmatpush1.msra.mxu0 %v381
    %453 = vmatprep.subr.mxu0 0.0
    %454 = vmatpush1.msra.mxu0 %v382
    %455 = vmatprep.subr.mxu0 0.0
    %456 = vmatpush1.msra.mxu0 %v383
    %457 = vmatprep.subr.mxu0 0.0
    %458 = vmatpush1.msra.mxu0 %v384
    %459 = vmatprep.subr.mxu0 0.0
    %460 = vmatpush1.msra.mxu0 %v385
    %461 = vmatprep.subr.mxu0 0.0
    %462 = vmatpush1.msra.mxu0 %v386
    %463 = vmatprep.subr.mxu0 0.0
    %464 = vmatpush1.msra.mxu0 %v387
    %465 = vmatprep.subr.mxu0 0.0
    %466 = vmatpush1.msra.mxu0 %v437
    %467 = vmatprep.subr.mxu0 0.0
    %468 = vmatpush1.msra.mxu0 0.0
    %469 = vmatprep.subr.mxu0 0.0
    %470 = vmatpush1.msra.mxu0 0.0
    %471 = vmatprep.subr.mxu0 0.0
    %472 = vmatpush1.msra.mxu0 0.0
    %473 = vmatprep.subr.mxu0 0.0
    %474 = vmatpush1.msra.mxu0 0.0
    %475 = vmatprep.subr.mxu0 0.0
    %476 = vmatpush1.msra.mxu0 0.0
    %477 = vmatprep.subr.mxu0 0.0
    %478 = vmatpush1.msra.mxu0 0.0
    %479 = vmatprep.subr.mxu0 0.0
    %480 = vmatpush1.msra.mxu0 0.0
    %481 = vmatprep.subr.mxu0 0.0
    %482 = vmatpush1.msra.mxu0 0.0
    %483 = vmatprep.subr.mxu0 0.0
    %484 = vmatpush1.msra.mxu0 0.0
    %485 = vmatprep.subr.mxu0 0.0
    %486 = vmatpush1.msra.mxu0 0.0
    %487 = vmatprep.subr.mxu0 0.0
    %488 = vmatpush1.msra.mxu0 0.0
    %489 = vmatprep.subr.mxu0 0.0
    %490 = vmatpush1.msra.mxu0 0.0
    %491 = vmatprep.subr.mxu0 0.0
    %492 = vmatpush1.msra.mxu0 0.0
    %493 = vmatprep.subr.mxu0 0.0
    %494 = vmatpush1.msra.mxu0 0.0
    %495 = vmatprep.subr.mxu0 0.0
    %496 = vmatpush1.msra.mxu0 0.0
    %497 = vmatprep.subr.mxu0 0.0
    %498 = vmatpush1.msra.mxu0 0.0
    %499 = vmatprep.subr.mxu0 0.0
    %500 = vmatpush1.msra.mxu0 0.0
    %501 = vmatprep.subr.mxu0 0.0
    %502 = vmatpush1.msra.mxu0 0.0
    %503 = vmatprep.mubr.f32.mxu0 0.0
    %504 = vmatmul.mubr.f32.gmra.mrb[0].mxu0 %v421
    %v505 = vpop.f32.mrb[0].mxu0
    %v506 = vadd.f32 %v397, %v505
    %v507 = vpop.f32.mrb[0].mxu0
    %508 = vmatprep.mubr.f32.mxu0 0.0
    %509 = vmatmul.mubr.f32.gmra.mrb[0].mxu0 %v424
    %v510 = vpop.f32.mrb[0].mxu0
    %v511 = vadd.f32 %v402, %v510
    %v512 = vpop.f32.mrb[0].mxu0
    %513 = vmatprep.mubr.f32.mxu0 0.0
    %514 = vmatmul.mubr.f32.gmra.mrb[0].mxu0 %v427
    %v515 = vpop.f32.mrb[0].mxu0
    %v516 = vadd.f32 %v407, %v515
    %v517 = vpop.f32.mrb[0].mxu0
    %518 = vmatprep.mubr.f32.mxu0 0.0
    %519 = vmatmul.mubr.f32.gmra.mrb[0].mxu0 %v430
    %v520 = vpop.f32.mrb[0].mxu0
    %v521 = vadd.f32 %v412, %v520
    %v522 = vpop.f32.mrb[0].mxu0
    %523 = vmatprep.mubr.f32.mxu0 0.0
    %524 = vmatmul.mubr.f32.gmra.mrb[0].mxu0 %v433
    %v525 = vpop.f32.mrb[0].mxu0
    %v526 = vadd.f32 %v417, %v525
    %v527 = vpop.f32.mrb[0].mxu0
    %528 = vdwg.mxu0
    %v529 = vmax.f32 %v506, 0.0
    %v530 = vmax.f32 %v511, 0.0
    %v531 = vmax.f32 %v516, 0.0
    %v532 = vmax.f32 %v521, 0.0
    %v533 = vmax.f32 %v526, 0.0
    %v534 = vld [vmem:[%s3] sm:$0xff]
    %v535 = vld [vmem:[%s3 + $0x8] sm:$0xff]
    %v536 = vld [vmem:[%s3 + $0x10] sm:$0xff]
    %v537 = vld [vmem:[%s3 + $0x18] sm:$0xff]
    %v538 = vld [vmem:[%s3 + $0x20] sm:$0xf]
    %540 = vset.pattern.permute.xlu0 0
    %541 = vperm.xlu0 %540, %v59
    %v542 = vpop.permute.xlu0 %541
    %545 = vset.pattern.permute.xlu0 0
    %546 = vperm.xlu0 %545, %v60
    %v547 = vpop.permute.xlu0 %546
    %550 = vset.pattern.permute.xlu0 0
    %551 = vperm.xlu0 %550, %v61
    %v552 = vpop.permute.xlu0 %551
    %555 = vset.pattern.permute.xlu0 0
    %556 = vperm.xlu0 %555, %v62
    %v557 = vpop.permute.xlu0 %556
    %560 = vset.pattern.permute.xlu0 0
    %561 = vperm.xlu0 %560, %v63
    %v562 = vpop.permute.xlu0 %561
    %vm564 = vcmask 293888
    %v566 = vsel %vm564, %v534, 0
    %v569 = vsel %vm564, %v535, 0
    %v572 = vsel %vm564, %v536, 0
    %v575 = vsel %vm564, %v537, 0
    %v578 = vsel %vm564, %v538, 0
    %v581 = vsel %vm435, %v533, 0
    %583 = vmatprep.subr.mxu0 0.0
    %584 = vmatpush1.msra.mxu0 %v529
    %585 = vmatprep.subr.mxu0 0.0
    %586 = vmatpush1.msra.mxu0 %v530
    %587 = vmatprep.subr.mxu0 0.0
    %588 = vmatpush1.msra.mxu0 %v531
    %589 = vmatprep.subr.mxu0 0.0
    %590 = vmatpush1.msra.mxu0 %v532
    %591 = vmatprep.subr.mxu0 0.0
    %592 = vmatpush1.msra.mxu0 %v581
    %593 = vmatprep.subr.mxu0 0.0
    %594 = vmatpush1.msra.mxu0 0.0
    %595 = vmatprep.subr.mxu0 0.0
    %596 = vmatpush1.msra.mxu0 0.0
    %597 = vmatprep.subr.mxu0 0.0
    %598 = vmatpush1.msra.mxu0 0.0
    %599 = vmatprep.subr.mxu0 0.0
    %600 = vmatpush1.msra.mxu0 0.0
    %601 = vmatprep.subr.mxu0 0.0
    %602 = vmatpush1.msra.mxu0 0.0
    %603 = vmatprep.subr.mxu0 0.0
    %604 = vmatpush1.msra.mxu0 0.0
    %605 = vmatprep.subr.mxu0 0.0
    %606 = vmatpush1.msra.mxu0 0.0
    %607 = vmatprep.subr.mxu0 0.0
    %608 = vmatpush1.msra.mxu0 0.0
    %609 = vmatprep.subr.mxu0 0.0
    %610 = vmatpush1.msra.mxu0 0.0
    %611 = vmatprep.subr.mxu0 0.0
    %612 = vmatpush1.msra.mxu0 0.0
    %613 = vmatprep.subr.mxu0 0.0
    %614 = vmatpush1.msra.mxu0 0.0
    %615 = vmatprep.subr.mxu0 0.0
    %616 = vmatpush1.msra.mxu0 0.0
    %617 = vmatprep.subr.mxu0 0.0
    %618 = vmatpush1.msra.mxu0 0.0
    %619 = vmatprep.subr.mxu0 0.0
    %620 = vmatpush1.msra.mxu0 0.0
    %621 = vmatprep.subr.mxu0 0.0
    %622 = vmatpush1.msra.mxu0 0.0
    %623 = vmatprep.subr.mxu0 0.0
    %624 = vmatpush1.msra.mxu0 0.0
    %625 = vmatprep.subr.mxu0 0.0
    %626 = vmatpush1.msra.mxu0 0.0
    %627 = vmatprep.subr.mxu0 0.0
    %628 = vmatpush1.msra.mxu0 0.0
    %629 = vmatprep.subr.mxu0 0.0
    %630 = vmatpush1.msra.mxu0 0.0
    %631 = vmatprep.subr.mxu0 0.0
    %632 = vmatpush1.msra.mxu0 0.0
    %633 = vmatprep.subr.mxu0 0.0
    %634 = vmatpush1.msra.mxu0 0.0
    %635 = vmatprep.subr.mxu0 0.0
    %636 = vmatpush1.msra.mxu0 0.0
    %637 = vmatprep.subr.mxu0 0.0
    %638 = vmatpush1.msra.mxu0 0.0
    %639 = vmatprep.subr.mxu0 0.0
    %640 = vmatpush1.msra.mxu0 0.0
    %641 = vmatprep.subr.mxu0 0.0
    %642 = vmatpush1.msra.mxu0 0.0
    %643 = vmatprep.subr.mxu0 0.0
    %644 = vmatpush1.msra.mxu0 0.0
    %645 = vmatprep.subr.mxu0 0.0
    %646 = vmatpush1.msra.mxu0 0.0
    %647 = vmatprep.mubr.f32.mxu0 0.0
    %648 = vmatmul.mubr.f32.gmra.mrb[0].mxu0 %v566
    %v649 = vpop.f32.mrb[0].mxu0
    %v650 = vadd.f32 %v542, %v649
    %v651 = vpop.f32.mrb[0].mxu0
    %652 = vmatprep.mubr.f32.mxu0 0.0
    %653 = vmatmul.mubr.f32.gmra.mrb[0].mxu0 %v569
    %v654 = vpop.f32.mrb[0].mxu0
    %v655 = vadd.f32 %v547, %v654
    %v656 = vpop.f32.mrb[0].mxu0
    %657 = vmatprep.mubr.f32.mxu0 0.0
    %658 = vmatmul.mubr.f32.gmra.mrb[0].mxu0 %v572
    %v659 = vpop.f32.mrb[0].mxu0
    %v660 = vadd.f32 %v552, %v659
    %v661 = vpop.f32.mrb[0].mxu0
    %662 = vmatprep.mubr.f32.mxu0 0.0
    %663 = vmatmul.mubr.f32.gmra.mrb[0].mxu0 %v575
    %v664 = vpop.f32.mrb[0].mxu0
    %v665 = vadd.f32 %v557, %v664
    %v666 = vpop.f32.mrb[0].mxu0
    %667 = vmatprep.mubr.f32.mxu0 0.0
    %668 = vmatmul.mubr.f32.gmra.mrb[0].mxu0 %v578
    %v669 = vpop.f32.mrb[0].mxu0
    %v670 = vadd.f32 %v562, %v669
    %v671 = vpop.f32.mrb[0].mxu0
    %672 = vdwg.mxu0
    %v673 = vsub.f32 0.0, %v650
    %v674 = vsub.f32 0.0, %v655
    %v675 = vsub.f32 0.0, %v660
    %v676 = vsub.f32 0.0, %v665
    %v677 = vsub.f32 0.0, %v670
    %v678 = vmul.f32 %v673, 1.442695
    %v679 = vpow.pop %v678
    %v680 = vmul.f32 %v674, 1.442695
    %v681 = vpow.pop %v680
    %v682 = vmul.f32 %v675, 1.442695
    %v683 = vpow.pop %v682
    %v684 = vmul.f32 %v676, 1.442695
    %v685 = vpow.pop %v684
    %v686 = vmul.f32 %v677, 1.442695
    %v687 = vpow.pop %v686
    %v688 = vadd.f32 %v679, 1.0
    %v689 = vadd.f32 %v681, 1.0
    %v690 = vadd.f32 %v683, 1.0
    %v691 = vadd.f32 %v685, 1.0
    %v692 = vadd.f32 %v687, 1.0
    %v693 = vrcp.pop %v688
    %v694 = vrcp.pop %v689
    %v695 = vrcp.pop %v690
    %v696 = vrcp.pop %v691
    %v697 = vrcp.pop %v692
    %v698 = vld [vmem:[%s4] sm:$0x3]
    %700 = vset.pattern.permute.xlu0 0
    %701 = vperm.xlu0 %700, %v64
    %v702 = vpop.permute.xlu0 %701
    %v705 = vsel %vm564, %v698, 0
    %v708 = vsel %vm435, %v697, 0
    %710 = vmatprep.subr.mxu0 0.0
    %711 = vmatpush1.msra.mxu0 %v693
    %712 = vmatprep.subr.mxu0 0.0
    %713 = vmatpush1.msra.mxu0 %v694
    %714 = vmatprep.subr.mxu0 0.0
    %715 = vmatpush1.msra.mxu0 %v695
    %716 = vmatprep.subr.mxu0 0.0
    %717 = vmatpush1.msra.mxu0 %v696
    %718 = vmatprep.subr.mxu0 0.0
    %719 = vmatpush1.msra.mxu0 %v708
    %720 = vmatprep.subr.mxu0 0.0
    %721 = vmatpush1.msra.mxu0 0.0
    %722 = vmatprep.subr.mxu0 0.0
    %723 = vmatpush1.msra.mxu0 0.0
    %724 = vmatprep.subr.mxu0 0.0
    %725 = vmatpush1.msra.mxu0 0.0
    %726 = vmatprep.subr.mxu0 0.0
    %727 = vmatpush1.msra.mxu0 0.0
    %728 = vmatprep.subr.mxu0 0.0
    %729 = vmatpush1.msra.mxu0 0.0
    %730 = vmatprep.subr.mxu0 0.0
    %731 = vmatpush1.msra.mxu0 0.0
    %732 = vmatprep.subr.mxu0 0.0
    %733 = vmatpush1.msra.mxu0 0.0
    %734 = vmatprep.subr.mxu0 0.0
    %735 = vmatpush1.msra.mxu0 0.0
    %736 = vmatprep.subr.mxu0 0.0
    %737 = vmatpush1.msra.mxu0 0.0
    %738 = vmatprep.subr.mxu0 0.0
    %739 = vmatpush1.msra.mxu0 0.0
    %740 = vmatprep.subr.mxu0 0.0
    %741 = vmatpush1.msra.mxu0 0.0
    %742 = vmatprep.subr.mxu0 0.0
    %743 = vmatpush1.msra.mxu0 0.0
    %744 = vmatprep.subr.mxu0 0.0
    %745 = vmatpush1.msra.mxu0 0.0
    %746 = vmatprep.subr.mxu0 0.0
    %747 = vmatpush1.msra.mxu0 0.0
    %748 = vmatprep.subr.mxu0 0.0
    %749 = vmatpush1.msra.mxu0 0.0
    %750 = vmatprep.subr.mxu0 0.0
    %751 = vmatpush1.msra.mxu0 0.0
    %752 = vmatprep.subr.mxu0 0.0
    %753 = vmatpush1.msra.mxu0 0.0
    %754 = vmatprep.subr.mxu0 0.0
    %755 = vmatpush1.msra.mxu0 0.0
    %756 = vmatprep.subr.mxu0 0.0
    %757 = vmatpush1.msra.mxu0 0.0
    %758 = vmatprep.subr.mxu0 0.0
    %759 = vmatpush1.msra.mxu0 0.0
    %760 = vmatprep.subr.mxu0 0.0
    %761 = vmatpush1.msra.mxu0 0.0
    %762 = vmatprep.subr.mxu0 0.0
    %763 = vmatpush1.msra.mxu0 0.0
    %764 = vmatprep.subr.mxu0 0.0
    %765 = vmatpush1.msra.mxu0 0.0
    %766 = vmatprep.subr.mxu0 0.0
    %767 = vmatpush1.msra.mxu0 0.0
    %768 = vmatprep.subr.mxu0 0.0
    %769 = vmatpush1.msra.mxu0 0.0
    %770 = vmatprep.subr.mxu0 0.0
    %771 = vmatpush1.msra.mxu0 0.0
    %772 = vmatprep.subr.mxu0 0.0
    %773 = vmatpush1.msra.mxu0 0.0
    %774 = vmatprep.mubr.f32.mxu0 0.0
    %775 = vmatmul.mubr.f32.gmra.mrb[0].mxu0 %v705
    %v776 = vpop.f32.mrb[0].mxu0
    %v777 = vadd.f32 %v702, %v776
    %v778 = vpop.f32.mrb[0].mxu0
    %779 = vdwg.mxu0
    %780 = vst [vmem:[#allocation2] sm:$0x3] %v777
    // Predicated region
    $region26: #{tpu_custom_call.1} parent=1 // pred_check
      _
    $region27: #{tpu_custom_call.1} parent=1 // pred_check_branch
      %782 = sbr.rel (0) target = $region29
    $region28: #{tpu_custom_call.1} parent=1 // pred_region
      %s784 = ssub.s32 32, 32
      %785 = vsyncadd [#allocation3], %s784
      %s787 = sshll.u32 [#allocation2], 4
      %s788 = int_to_ptr.vmem [resolvable:$true] %s787
      %790 = dma.vmem_to_hbm [thread:$0]  %s788, 32, %s6, [#allocation3]
    $region29: #{tpu_custom_call.1} parent=1 // pred_fallthru
      _
    // Predicated region
    $region30: #{tpu_custom_call.1} parent=1 // pred_check
      _
    $region31: #{tpu_custom_call.1} parent=1 // pred_check_branch
      %792 = sbr.rel (0) target = $region33
    $region32: #{tpu_custom_call.1} parent=1 // pred_region
      %793 = dma.done [#allocation3], 32
    $region33: #{tpu_custom_call.1} parent=1 // pred_fallthru
      _
    %794 = vsyncpa [#allocation3], 1

</llo_original>
